<compile_context>
chip_gen: v5e
topology: v5e:2x2
jax: 0.10.0
libtpu: 0.0.40
codegen_flags: <defaults>
</compile_context>

<pallas_src>
import functools

import jax
import jax.numpy as jnp
from jax.experimental import pallas as pl
from jax.experimental.pallas import tpu as pltpu

LANES = 128
MAX_TILE_ROWS = 2048  # (2048, 128) f32 block = 1 MiB per input per pipeline buffer


def _dice_partial_kernel(o_ref, t_ref, part_ref, *, rows_total, tile_r, acc_rows,
                         need_mask):
    """Per grid step, writes lane-dense partial sums into its own output block:
    rows [0:acc_rows]          = per-lane partial sums of o*t   (numerator)
    rows [acc_rows:2*acc_rows] = per-lane partial sums of o+t   (denominator)."""
    i = pl.program_id(0)

    o = o_ref[...].astype(jnp.float32)
    t = t_ref[...].astype(jnp.float32)
    prod = o * t          # numerator terms
    den = o + t           # fused denominator terms: sum(o) + sum(t) == sum(o + t)

    if need_mask:
        # The last block may run past the end of the array; zero the garbage rows.
        row = jax.lax.broadcasted_iota(jnp.int32, (tile_r, LANES), 0)
        valid = (i * tile_r + row) < rows_total
        prod = jnp.where(valid, prod, 0.0)
        den = jnp.where(valid, den, 0.0)

    if acc_rows == 8:
        # Fold (tile_r,128) -> (8,128): pure VPU adds across sublane tiles,
        # no cross-lane (XLU) reduction inside the grid loop.
        num_part = prod.reshape(tile_r // 8, 8, LANES).sum(axis=0)
        den_part = den.reshape(tile_r // 8, 8, LANES).sum(axis=0)
    else:
        # Single-block fallback when the row count is not a multiple of 8.
        num_part = prod.sum(axis=0, keepdims=True)
        den_part = den.sum(axis=0, keepdims=True)

    part_ref[0, :acc_rows, :] = num_part
    part_ref[0, acc_rows:, :] = den_part


def dice_loss(output, target, smooth=0.0, eps=1e-07):
    assert output.shape == target.shape
    o = output.reshape(-1)
    t = target.reshape(-1)
    # Keep native floating dtype (bf16 stays bf16 -> half the HBM traffic and is
    # cast to f32 inside the kernel); only non-float inputs (e.g. bool masks)
    # are cast in the wrapper.
    if not jnp.issubdtype(o.dtype, jnp.floating):
        o = o.astype(jnp.float32)
    if not jnp.issubdtype(t.dtype, jnp.floating):
        t = t.astype(jnp.float32)

    n = o.shape[0]
    rows = n // LANES
    rem = n - rows * LANES

    # Tail of < 128 elements is reduced directly in the wrapper (negligible);
    # this avoids jnp.pad, which would copy both full tensors through HBM.
    tail_num = jnp.float32(0.0)
    tail_den = jnp.float32(0.0)
    if rem:
        o_tail = o[rows * LANES:].astype(jnp.float32)
        t_tail = t[rows * LANES:].astype(jnp.float32)
        tail_num = jnp.sum(o_tail * t_tail)
        tail_den = jnp.sum(o_tail + t_tail)

    if rows == 0:
        # Degenerate (<128-element) input: nothing for the kernel to do.
        num = 2.0 * tail_num + smooth
        den = tail_den + smooth + eps
        return (1.0 - num / den).astype(jnp.float32)

    o2 = o[: rows * LANES].reshape(rows, LANES)
    t2 = t[: rows * LANES].reshape(rows, LANES)

    if rows <= MAX_TILE_ROWS:
        tile_r = rows            # single block == full array dim (always legal)
        need_mask = False
    else:
        tile_r = MAX_TILE_ROWS
        need_mask = (rows % tile_r) != 0
    acc_rows = 8 if (tile_r % 8 == 0) else 1
    num_blocks = pl.cdiv(rows, tile_r)

    kernel = functools.partial(
        _dice_partial_kernel,
        rows_total=rows, tile_r=tile_r, acc_rows=acc_rows, need_mask=need_mask)

    # NOTE: on v5e, if the per-step DMA is still exposed at this block size,
    # pipeline_mode=pl.Buffered(3) on the two input BlockSpecs is the next knob.
    partials = pl.pallas_call(
        kernel,
        out_shape=jax.ShapeDtypeStruct((num_blocks, 2 * acc_rows, LANES),
                                       jnp.float32),
        grid_spec=pltpu.PrefetchScalarGridSpec(
            num_scalar_prefetch=0,
            grid=(num_blocks,),
            in_specs=[
                pl.BlockSpec((tile_r, LANES), lambda i: (i, 0)),
                pl.BlockSpec((tile_r, LANES), lambda i: (i, 0)),
            ],
            out_specs=pl.BlockSpec((1, 2 * acc_rows, LANES),
                                   lambda i: (i, 0, 0)),
        ),
        compiler_params=pltpu.CompilerParams(
            # No carried state across the grid -> both TensorCores may split the
            # grid on v7x; measured-neutral on single-TC v5e/v6e.
            dimension_semantics=("parallel",),
        ),
    )(o2, t2)

    # Tiny final combine (num_blocks * 2 * acc_rows * 128 floats) in JAX.
    num_sum = jnp.sum(partials[:, :acc_rows, :]) + tail_num
    den_sum = jnp.sum(partials[:, acc_rows:, :]) + tail_den
    num = 2.0 * num_sum + smooth
    den = den_sum + smooth + eps
    return (1.0 - num / den).astype(jnp.float32)


def dice_loss_ref(output, target, smooth=0.0, eps=1e-07):
    o = output.astype(jnp.float32)
    t = target.astype(jnp.float32)
    return 1.0 - (2.0 * jnp.sum(o * t) + smooth) / (
        jnp.sum(o) + jnp.sum(t) + smooth + eps)


if __name__ == "__main__":
    key = jax.random.PRNGKey(0)
    k1, k2, k3, k4 = jax.random.split(key, 4)

    # Small NCHW case (single-block path).
    shape = (2, 4, 16, 16)
    output = jax.nn.sigmoid(jax.random.normal(k1, shape, dtype=jnp.float32))
    target = (jax.random.uniform(k2, shape) > 0.5).astype(jnp.float32)
    loss = jax.block_until_ready(dice_loss(output, target, smooth=0.0, eps=1e-07))
    ref = dice_loss_ref(output, target, smooth=0.0, eps=1e-07)
    assert jnp.allclose(loss, ref, rtol=1e-5, atol=1e-6), (loss, ref)

    # Larger case exercising the multi-block "parallel" path with a masked
    # ragged last block (rows = 2560, tile = 2048 -> 2 blocks).
    shape2 = (1, 8, 320, 128)
    output2 = jax.nn.sigmoid(jax.random.normal(k3, shape2, dtype=jnp.float32))
    target2 = (jax.random.uniform(k4, shape2) > 0.5).astype(jnp.float32)
    loss2 = jax.block_until_ready(dice_loss(output2, target2, smooth=1.0, eps=1e-07))
    ref2 = dice_loss_ref(output2, target2, smooth=1.0, eps=1e-07)
    assert jnp.allclose(loss2, ref2, rtol=1e-5, atol=1e-6), (loss2, ref2)

    print("KERNEL_OK")
</pallas_src>

<mosaic_0001>
module attributes {stable_mosaic.version = 11 : i64} {
  func.func @_dice_partial_kernel(%arg0: i32, %arg1: memref<16x128xf32, #tpu.memory_space<vmem>>, %arg2: memref<16x128xf32, #tpu.memory_space<vmem>>, %arg3: memref<1x16x128xf32, #tpu.memory_space<vmem>>) attributes {dimension_semantics = [#tpu.dimension_semantics<parallel>], iteration_bounds = array<i64: 1>, scalar_prefetch = 0 : i64, scratch_operands = 0 : i64, tpu.core_type = #tpu.core_type<tc>, window_params = [{transform_indices = @transform_0, window_bounds = array<i64: 16, 128>}, {transform_indices = @transform_1, window_bounds = array<i64: 16, 128>}, {transform_indices = @transform_2, window_bounds = array<i64: 1, 16, 128>}]} {
    %c0 = arith.constant 0 : index
    %c0_0 = arith.constant 0 : index
    %0 = vector.load %arg1[%c0, %c0_0] : memref<16x128xf32, #tpu.memory_space<vmem>>, vector<16x128xf32>
    %c0_1 = arith.constant 0 : index
    %c0_2 = arith.constant 0 : index
    %1 = vector.load %arg2[%c0_1, %c0_2] : memref<16x128xf32, #tpu.memory_space<vmem>>, vector<16x128xf32>
    %2 = arith.mulf %0, %1 : vector<16x128xf32>
    %3 = arith.addf %0, %1 : vector<16x128xf32>
    %4 = vector.shape_cast %2 : vector<16x128xf32> to vector<2x8x128xf32>
    %cst = arith.constant dense<0.000000e+00> : vector<8x128xf32>
    %5 = vector.multi_reduction <add>, %4, %cst [0] : vector<2x8x128xf32> to vector<8x128xf32>
    %6 = vector.shape_cast %3 : vector<16x128xf32> to vector<2x8x128xf32>
    %cst_3 = arith.constant dense<0.000000e+00> : vector<8x128xf32>
    %7 = vector.multi_reduction <add>, %6, %cst_3 [0] : vector<2x8x128xf32> to vector<8x128xf32>
    %c0_4 = arith.constant 0 : index
    %c0_5 = arith.constant 0 : index
    %c0_6 = arith.constant 0 : index
    %8 = vector.load %arg3[%c0_4, %c0_5, %c0_6] : memref<1x16x128xf32, #tpu.memory_space<vmem>>, vector<1x8x128xf32>
    %9 = vector.shape_cast %8 : vector<1x8x128xf32> to vector<8x128xf32>
    %10 = vector.shape_cast %5 : vector<8x128xf32> to vector<1x8x128xf32>
    tpu.vector_store %arg3[%c0_4, %c0_5, %c0_6], %10 {strides = array<i32>} : memref<1x16x128xf32, #tpu.memory_space<vmem>>, vector<1x8x128xf32>,
    %c0_7 = arith.constant 0 : index
    %c8 = arith.constant 8 : index
    %c0_8 = arith.constant 0 : index
    %11 = vector.load %arg3[%c0_7, %c8, %c0_8] : memref<1x16x128xf32, #tpu.memory_space<vmem>>, vector<1x8x128xf32>
    %12 = vector.shape_cast %11 : vector<1x8x128xf32> to vector<8x128xf32>
    %13 = vector.shape_cast %7 : vector<8x128xf32> to vector<1x8x128xf32>
    tpu.vector_store %arg3[%c0_7, %c8, %c0_8], %13 {strides = array<i32>} : memref<1x16x128xf32, #tpu.memory_space<vmem>>, vector<1x8x128xf32>,
    return
  }
  func.func @transform_0(%arg0: i32) -> (i32, i32) {
    %c0_i32 = arith.constant 0 : i32
    %c0_i32_0 = arith.constant 0 : i32
    return %arg0, %c0_i32 : i32, i32
  }
  func.func @transform_1(%arg0: i32) -> (i32, i32) {
    %c0_i32 = arith.constant 0 : i32
    %c0_i32_0 = arith.constant 0 : i32
    return %arg0, %c0_i32 : i32, i32
  }
  func.func @transform_2(%arg0: i32) -> (i32, i32, i32) {
    %c0_i32 = arith.constant 0 : i32
    %c0_i32_0 = arith.constant 0 : i32
    %c0_i32_1 = arith.constant 0 : i32
    return %arg0, %c0_i32, %c0_i32_0 : i32, i32, i32
  }
}

</mosaic_0001>

<llo_original>
// kernel: tpu_custom_call.1
$region0: #{tpu_custom_call.1}
  #allocation0 [shape = 'u32[]', space=smem, size = 0x4, offset = 0x4, fixed_abs, tag = 'smem constant byte address 0x4 - core index']
  #allocation1 [shape = 'u32[72,128]{1,0:T(1,128)}', space=vmem, size = 0x9000, scoped, tag = 'internal scratch']
  %s0 = inlined_call_operand.hbm [shape: f32[16,128], index: 0, kind: input, shape index: {}]
  %s1 = inlined_call_operand.hbm [shape: f32[16,128], index: 1, kind: input, shape index: {}]
  %s2 = inlined_call_operand.hbm [shape: f32[1,16,128], index: 2, kind: output, shape index: {}]
  %s3 = sld [smem:[#allocation0]]
  $region26: #{tpu_custom_call.1} parent=0
    _
  %s5 = ssub.s32 1, %s3
  %s6 = scalar_select 0, %s5, %s3
  $region1: #{tpu_custom_call.1} parent=0
    #allocation2 [shape = 'u8[8192]{0}', space=vmem, size = 0x2000, scoped, tag = 'input window, operand 0, single buffered']
    #allocation3 [shape = 's32[1]{0}', space=sflag, size = 0x4, scoped, tag = 'scoped memory for tpu_custom_call.1']
    #allocation4 [shape = 's32[1]{0}', space=sflag, size = 0x4, scoped, tag = 'scoped memory for tpu_custom_call.1']
    #allocation5 [shape = 'u8[8192]{0}', space=vmem, size = 0x2000, scoped, tag = 'input window, operand 1, single buffered']
    #allocation6 [shape = 's32[1]{0}', space=sflag, size = 0x4, scoped, tag = 'scoped memory for tpu_custom_call.1']
    #allocation7 [shape = 'u8[8192]{0}', space=vmem, size = 0x2000, scoped, tag = 'output window, operand 0, single buffered']
    %7 = vsyncpa [#allocation3], 0
    %8 = vsyncpa [#allocation6], 0
    %9 = vsyncpa [#allocation4], 0
    // Predicated region
    $region2: #{tpu_custom_call.1} parent=1 // pred_check
      _
    $region3: #{tpu_custom_call.1} parent=1 // pred_check_branch
      %11 = sbr.rel (0) target = $region5
    $region4: #{tpu_custom_call.1} parent=1 // pred_region
      %13 = vsyncadd [#allocation3], 0
      %s14 = sshll.u32 %s0, 4
      %s15 = int_to_ptr.hbm [resolvable:$true] %s14
      %s16 = sshll.u32 [#allocation2], 4
      %s17 = int_to_ptr.vmem [resolvable:$true] %s16
      %22 = dma.hbm_to_vmem [thread:$0]  %s15, 256, %s17, [#allocation3], 128, 128, 8
    $region5: #{tpu_custom_call.1} parent=1 // pred_fallthru
      _
    // Predicated region
    $region6: #{tpu_custom_call.1} parent=1 // pred_check
      _
    $region7: #{tpu_custom_call.1} parent=1 // pred_check_branch
      %24 = sbr.rel (0) target = $region9
    $region8: #{tpu_custom_call.1} parent=1 // pred_region
      %26 = vsyncadd [#allocation6], 0
      %s27 = sshll.u32 %s1, 4
      %s28 = int_to_ptr.hbm [resolvable:$true] %s27
      %s29 = sshll.u32 [#allocation5], 4
      %s30 = int_to_ptr.vmem [resolvable:$true] %s29
      %35 = dma.hbm_to_vmem [thread:$0]  %s28, 256, %s30, [#allocation6], 128, 128, 8
    $region9: #{tpu_custom_call.1} parent=1 // pred_fallthru
      _
    // Predicated region
    $region10: #{tpu_custom_call.1} parent=1 // pred_check
      _
    $region11: #{tpu_custom_call.1} parent=1 // pred_check_branch
      %37 = sbr.rel (0) target = $region13
    $region12: #{tpu_custom_call.1} parent=1 // pred_region
      %39 = dma.done [#allocation3], 256
    $region13: #{tpu_custom_call.1} parent=1 // pred_fallthru
      _
    // Predicated region
    $region14: #{tpu_custom_call.1} parent=1 // pred_check
      _
    $region15: #{tpu_custom_call.1} parent=1 // pred_check_branch
      %41 = sbr.rel (0) target = $region17
    $region16: #{tpu_custom_call.1} parent=1 // pred_region
      %43 = dma.done [#allocation6], 256
    $region17: #{tpu_custom_call.1} parent=1 // pred_fallthru
      _
    %v44 = vld [vmem:[#allocation2] sm:$0xff]
    %v45 = vld [vmem:[#allocation2 + $0x8] sm:$0xff]
    %v46 = vld [vmem:[#allocation5] sm:$0xff]
    %v47 = vld [vmem:[#allocation5 + $0x8] sm:$0xff]
    %v48 = vmul.f32 %v44, %v46
    %v49 = vmul.f32 %v45, %v47
    %v50 = vadd.f32 %v44, %v46
    %v51 = vadd.f32 %v45, %v47
    %v52 = vadd.f32 %v48, %v49
    %v53 = vadd.f32 %v50, %v51
    %54 = vst [vmem:[#allocation7] sm:$0xff] %v52
    %55 = vst [vmem:[#allocation7 + $0x8] sm:$0xff] %v53
    // Predicated region
    $region18: #{tpu_custom_call.1} parent=1 // pred_check
      _
    $region19: #{tpu_custom_call.1} parent=1 // pred_check_branch
      %57 = sbr.rel (0) target = $region21
    $region20: #{tpu_custom_call.1} parent=1 // pred_region
      %59 = vsyncadd [#allocation4], 0
      %s60 = sshll.u32 [#allocation7], 4
      %s61 = int_to_ptr.vmem [resolvable:$true] %s60
      %s62 = sshll.u32 %s2, 4
      %s63 = int_to_ptr.hbm [resolvable:$true] %s62
      %68 = dma.vmem_to_hbm [thread:$0]  %s61, 256, %s63, [#allocation4], 128, 128, 8
    $region21: #{tpu_custom_call.1} parent=1 // pred_fallthru
      _
    // Predicated region
    $region22: #{tpu_custom_call.1} parent=1 // pred_check
      _
    $region23: #{tpu_custom_call.1} parent=1 // pred_check_branch
      %70 = sbr.rel (0) target = $region25
    $region24: #{tpu_custom_call.1} parent=1 // pred_region
      %72 = dma.done [#allocation4], 256
    $region25: #{tpu_custom_call.1} parent=1 // pred_fallthru
      _
    %73 = vsyncpa [#allocation3], 1
    %74 = vsyncpa [#allocation6], 1
    %75 = vsyncpa [#allocation4], 1

</llo_original>
